<compile_context>
chip_gen: v6e
topology: v6e:2x2x1
jax: 0.10.0
libtpu: 0.0.40
codegen_flags: <defaults>
</compile_context>

<pallas_src>
import math
from functools import partial

import jax
import jax.numpy as jnp
from jax.experimental import pallas as pl
from jax.experimental.pallas import tpu as pltpu


def _round_up(n, m):
    return ((n + m - 1) // m) * m


def _cdiv(a, b):
    return (a + b - 1) // b


def dqn_kernel(x_ref, w1_ref, w2_ref, aux_ref, b3_ref, o_ref):
    # x_ref:   (8, TILE_B)  rows 0..3 = features, row 4 = 1.0 (bias lane), 5..7 = 0
    # w1_ref:  (64, 8)      cols 0..3 = fc1 weight, col 4 = fc1 bias, 5..7 = 0
    # w2_ref:  (64, 64)     fc2 weight
    # aux_ref: (64, 2)      col 0 = fc2 bias, col 1 = out_layer weight (column)
    # b3_ref:  (1, 1) SMEM  out_layer bias
    # o_ref:   (1, TILE_B)  lane-dense output slab
    x = x_ref[...]

    # fc1 on the MXU (K=8, sublane-aligned; bias folded via the constant-1 row).
    h1 = jnp.dot(w1_ref[...], x, preferred_element_type=jnp.float32)
    h1 = jnp.maximum(h1, 0.0)                                    # (64, TILE_B)

    # fc2 on the MXU; bias + ReLU on the VPU.
    h2 = jnp.dot(w2_ref[...], h1, preferred_element_type=jnp.float32)
    h2 = jnp.maximum(h2 + aux_ref[:, 0:1], 0.0)                  # (64, TILE_B)

    # out_layer (N=1): VPU multiply + sublane reduce (XLU slot); result is
    # already lane-dense (1, TILE_B).
    out = jnp.sum(h2 * aux_ref[:, 1:2], axis=0, keepdims=True)
    o_ref[...] = (out + b3_ref[0, 0]).astype(o_ref.dtype)


@partial(jax.jit, static_argnames=("tile_b",))
def custom_deep_q_network(x, params, *, tile_b=None):
    """x: (B, 4) float32 -> (B, 1) float32. Torch-layout params."""
    w1, b1, w2, b2, w3, b3 = params
    B = x.shape[0]
    b128 = _round_up(B, 128)

    # Tile selection: as large as useful (cap 8192 -> ~5 MiB/step, safe under
    # every generation's scoped-VMEM default), but guarantee >= 2 grid steps
    # whenever the padded batch allows, so v7x megacore gets both cores busy.
    if tile_b is None:
        if b128 >= 256:
            tile_b = min(8192, _round_up(_cdiv(b128, 2), 128))
        else:
            tile_b = 128
    else:
        tile_b = max(128, min(_round_up(tile_b, 128), b128))
    num_tiles = _cdiv(B, tile_b)
    b_pad = num_tiles * tile_b

    # Layout plumbing (fused inside this jit): batch on lanes, features on
    # sublanes, plus a constant-1 row so the fc1 bias folds into the matmul.
    x_aug = jnp.concatenate(
        [x.T.astype(jnp.float32),
         jnp.ones((1, B), jnp.float32),
         jnp.zeros((3, B), jnp.float32)], axis=0)                 # (8, B)
    if b_pad != B:
        x_aug = jnp.pad(x_aug, ((0, 0), (0, b_pad - B)))          # (8, b_pad)

    w1_aug = jnp.concatenate(
        [w1, b1.reshape(64, 1), jnp.zeros((64, 3), jnp.float32)], axis=1)  # (64, 8)
    aux = jnp.concatenate([b2.reshape(64, 1), w3.reshape(64, 1)], axis=1)  # (64, 2)
    b3_smem = b3.reshape(1, 1)

    out = pl.pallas_call(
        dqn_kernel,
        out_shape=jax.ShapeDtypeStruct((1, b_pad), jnp.float32),
        grid=(num_tiles,),
        in_specs=[
            pl.BlockSpec((8, tile_b), lambda i: (0, i)),          # x tile
            pl.BlockSpec((64, 8), lambda i: (0, 0)),              # [w1 | b1] resident
            pl.BlockSpec((64, 64), lambda i: (0, 0)),             # w2 resident
            pl.BlockSpec((64, 2), lambda i: (0, 0)),              # [b2 | w3] resident
            pl.BlockSpec(memory_space=pltpu.MemorySpace.SMEM),    # b3 scalar
        ],
        out_specs=pl.BlockSpec((1, tile_b), lambda i: (0, i)),
        compiler_params=pltpu.CompilerParams(
            dimension_semantics=("parallel",)),
    )(x_aug, w1_aug, w2, aux, b3_smem)

    return out.reshape(b_pad, 1)[:B]


def xavier_uniform(key, shape, fan_in, fan_out):
    # Matches torch.nn.init.xavier_uniform_ (gain=1): U(-a, a), a=sqrt(6/(fi+fo)).
    a = math.sqrt(6.0 / (fan_in + fan_out))
    return jax.random.uniform(key, shape, dtype=jnp.float32, minval=-a, maxval=a)


def init_params(key):
    # Torch-native layouts: weight (out, in), bias (out,). Biases zero per spec.
    k1, k2, k3 = jax.random.split(key, 3)
    w1 = xavier_uniform(k1, (64, 4), fan_in=4, fan_out=64)
    b1 = jnp.zeros((64,), jnp.float32)
    w2 = xavier_uniform(k2, (64, 64), fan_in=64, fan_out=64)
    b2 = jnp.zeros((64,), jnp.float32)
    w3 = xavier_uniform(k3, (1, 64), fan_in=64, fan_out=1)
    b3 = jnp.zeros((1,), jnp.float32)
    return (w1, b1, w2, b2, w3, b3)


def reference_forward(x, params):
    w1, b1, w2, b2, w3, b3 = params
    h1 = jnp.maximum(x @ w1.T + b1, 0.0)
    h2 = jnp.maximum(h1 @ w2.T + b2, 0.0)
    return h2 @ w3.T + b3


if __name__ == "__main__":
    key = jax.random.PRNGKey(0)
    pkey, xkey1, xkey2, bkey = jax.random.split(key, 4)
    params = init_params(pkey)

    # Small batch of 4-dim observations (CartPole-like state), single tile.
    x_small = jax.random.normal(xkey1, (8, 4), dtype=jnp.float32)
    out_small = jax.block_until_ready(custom_deep_q_network(x_small, params))
    ref_small = reference_forward(x_small, params)
    assert out_small.shape == (8, 1), out_small.shape
    assert jnp.allclose(out_small, ref_small, atol=1e-4, rtol=1e-4), \
        "mismatch vs reference (small batch)"

    # Larger, non-multiple-of-tile batch with NONZERO biases to exercise the
    # multi-tile grid (>=2 steps -> v7x megacore path), tail padding, and the
    # folded-bias fc1 path.
    bk1, bk2, bk3 = jax.random.split(bkey, 3)
    params_nz = (params[0],
                 0.1 * jax.random.normal(bk1, (64,), dtype=jnp.float32),
                 params[2],
                 0.1 * jax.random.normal(bk2, (64,), dtype=jnp.float32),
                 params[4],
                 0.1 * jax.random.normal(bk3, (1,), dtype=jnp.float32))
    x_big = jax.random.normal(xkey2, (300, 4), dtype=jnp.float32)
    out_big = jax.block_until_ready(custom_deep_q_network(x_big, params_nz))
    ref_big = reference_forward(x_big, params_nz)
    assert out_big.shape == (300, 1), out_big.shape
    assert jnp.allclose(out_big, ref_big, atol=1e-4, rtol=1e-4), \
        "mismatch vs reference (batched grid, nonzero biases)"

    print("KERNEL_OK")
</pallas_src>

<mosaic_0001>
module attributes {stable_mosaic.version = 11 : i64} {
  func.func @dqn_kernel(%arg0: i32, %arg1: memref<8x128xf32, #tpu.memory_space<vmem>>, %arg2: memref<64x8xf32, #tpu.memory_space<vmem>>, %arg3: memref<64x64xf32, #tpu.memory_space<vmem>>, %arg4: memref<64x2xf32, #tpu.memory_space<vmem>>, %arg5: memref<1x1xf32, #tpu.memory_space<smem>>, %arg6: memref<1x128xf32, #tpu.memory_space<vmem>>) attributes {dimension_semantics = [#tpu.dimension_semantics<parallel>], iteration_bounds = array<i64: 1>, scalar_prefetch = 0 : i64, scratch_operands = 0 : i64, tpu.core_type = #tpu.core_type<tc>, window_params = [{transform_indices = @transform_0, window_bounds = array<i64: 8, 128>}, {pipeline_mode = #tpu.pipeline_mode<synchronous>, transform_indices = @transform_1, window_bounds = array<i64: 64, 8>}, {pipeline_mode = #tpu.pipeline_mode<synchronous>, transform_indices = @transform_2, window_bounds = array<i64: 64, 64>}, {pipeline_mode = #tpu.pipeline_mode<synchronous>, transform_indices = @transform_3, window_bounds = array<i64: 64, 2>}, {transform_indices = @transform_4, window_bounds = array<i64: 1, 1>}, {transform_indices = @transform_5, window_bounds = array<i64: 1, 128>}]} {
    %c0 = arith.constant 0 : index
    %c0_0 = arith.constant 0 : index
    %0 = vector.load %arg1[%c0, %c0_0] : memref<8x128xf32, #tpu.memory_space<vmem>>, vector<8x128xf32>
    %c0_1 = arith.constant 0 : index
    %c0_2 = arith.constant 0 : index
    %1 = vector.load %arg2[%c0_1, %c0_2] : memref<64x8xf32, #tpu.memory_space<vmem>>, vector<64x8xf32>
    %cst = arith.constant dense<0.000000e+00> : vector<64x128xf32>
    %2 = tpu.matmul %1, %0, %cst {dimension_numbers = #tpu.dot_dimension_numbers<[1], [0], [0], [1], [0, 0, 1, 1], [], []>} : vector<64x8xf32>, vector<8x128xf32>, vector<64x128xf32> -> vector<64x128xf32>
    %cst_3 = arith.constant 0.000000e+00 : f32
    %3 = vector.broadcast %cst_3 : f32 to vector<64x128xf32>
    %4 = arith.maximumf %2, %3 : vector<64x128xf32>
    %c0_4 = arith.constant 0 : index
    %c0_5 = arith.constant 0 : index
    %5 = vector.load %arg3[%c0_4, %c0_5] : memref<64x64xf32, #tpu.memory_space<vmem>>, vector<64x64xf32>
    %cst_6 = arith.constant dense<0.000000e+00> : vector<64x128xf32>
    %6 = tpu.matmul %5, %4, %cst_6 {dimension_numbers = #tpu.dot_dimension_numbers<[1], [0], [0], [1], [0, 0, 1, 1], [], []>} : vector<64x64xf32>, vector<64x128xf32>, vector<64x128xf32> -> vector<64x128xf32>
    %c0_7 = arith.constant 0 : index
    %c0_8 = arith.constant 0 : index
    %7 = vector.load %arg4[%c0_7, %c0_8] : memref<64x2xf32, #tpu.memory_space<vmem>>, vector<64x1xf32>
    %8 = vector.broadcast %7 : vector<64x1xf32> to vector<64x128xf32>
    %9 = arith.addf %6, %8 : vector<64x128xf32>
    %cst_9 = arith.constant 0.000000e+00 : f32
    %10 = vector.broadcast %cst_9 : f32 to vector<64x128xf32>
    %11 = arith.maximumf %9, %10 : vector<64x128xf32>
    %c0_10 = arith.constant 0 : index
    %c1 = arith.constant 1 : index
    %12 = vector.load %arg4[%c0_10, %c1] : memref<64x2xf32, #tpu.memory_space<vmem>>, vector<64x1xf32>
    %13 = vector.broadcast %12 : vector<64x1xf32> to vector<64x128xf32>
    %14 = arith.mulf %11, %13 : vector<64x128xf32>
    %cst_11 = arith.constant dense<0.000000e+00> : vector<128xf32>
    %15 = vector.multi_reduction <add>, %14, %cst_11 [0] : vector<64x128xf32> to vector<128xf32>
    %16 = vector.shape_cast %15 : vector<128xf32> to vector<1x128xf32>
    %c0_12 = arith.constant 0 : index
    %c0_13 = arith.constant 0 : index
    %17 = memref.load %arg5[%c0_12, %c0_13] : memref<1x1xf32, #tpu.memory_space<smem>>
    %18 = vector.broadcast %17 : f32 to vector<1x128xf32>
    %19 = arith.addf %16, %18 : vector<1x128xf32>
    %c0_14 = arith.constant 0 : index
    %c0_15 = arith.constant 0 : index
    %20 = vector.load %arg6[%c0_14, %c0_15] : memref<1x128xf32, #tpu.memory_space<vmem>>, vector<1x128xf32>
    tpu.vector_store %arg6[%c0_14, %c0_15], %19 {strides = array<i32>} : memref<1x128xf32, #tpu.memory_space<vmem>>, vector<1x128xf32>,
    return
  }
  func.func @transform_0(%arg0: i32) -> (i32, i32) {
    %c0_i32 = arith.constant 0 : i32
    %c0_i32_0 = arith.constant 0 : i32
    return %c0_i32, %arg0 : i32, i32
  }
  func.func @transform_1(%arg0: i32) -> (i32, i32) {
    %c0_i32 = arith.constant 0 : i32
    %c0_i32_0 = arith.constant 0 : i32
    %c0_i32_1 = arith.constant 0 : i32
    return %c0_i32, %c0_i32_0 : i32, i32
  }
  func.func @transform_2(%arg0: i32) -> (i32, i32) {
    %c0_i32 = arith.constant 0 : i32
    %c0_i32_0 = arith.constant 0 : i32
    %c0_i32_1 = arith.constant 0 : i32
    return %c0_i32, %c0_i32_0 : i32, i32
  }
  func.func @transform_3(%arg0: i32) -> (i32, i32) {
    %c0_i32 = arith.constant 0 : i32
    %c0_i32_0 = arith.constant 0 : i32
    %c0_i32_1 = arith.constant 0 : i32
    return %c0_i32, %c0_i32_0 : i32, i32
  }
  func.func @transform_4(%arg0: i32) -> (i32, i32) {
    %c0_i32 = arith.constant 0 : i32
    %c0_i32_0 = arith.constant 0 : i32
    %c0_i32_1 = arith.constant 0 : i32
    return %c0_i32, %c0_i32_0 : i32, i32
  }
  func.func @transform_5(%arg0: i32) -> (i32, i32) {
    %c0_i32 = arith.constant 0 : i32
    %c0_i32_0 = arith.constant 0 : i32
    return %c0_i32, %arg0 : i32, i32
  }
}

</mosaic_0001>

<llo_original>
// kernel: custom_deep_q_network.1
$region0: #{custom_deep_q_network.1}
  #allocation0 [shape = 'u32[]', space=smem, size = 0x4, offset = 0x4, fixed_abs, tag = 'smem constant byte address 0x4 - core index']
  #allocation1 [shape = 'u32[144,128]{1,0:T(1,128)}', space=vmem, size = 0x12000, scoped, tag = 'internal scratch']
  #allocation2 [shape = 'f32[1,1]{1,0:T(1,128)S(6)}', space=smem, size = 0x200, scoped, tag = 'scoped memory for custom_deep_q_network.1']
  %s0 = inlined_call_operand.vmem [shape: f32[8,128], index: 0, kind: input, shape index: {}]
  %s1 = inlined_call_operand.vmem [shape: f32[64,8], index: 1, kind: input, shape index: {}]
  %s2 = inlined_call_operand.vmem [shape: f32[64,64], index: 2, kind: input, shape index: {}]
  %s3 = inlined_call_operand.vmem [shape: f32[64,2], index: 3, kind: input, shape index: {}]
  %s4 = inlined_call_operand.<no memory space> [shape: f32[1,1], index: 4, kind: input, shape index: {}]
  %s5 = inlined_call_operand.vmem [shape: f32[1,128], index: 5, kind: output, shape index: {}]
  %s6 = sld [smem:[#allocation0]]
  $region30: #{custom_deep_q_network.1} parent=0
    _
  %s8 = ssub.s32 1, %s6
  %s9 = scalar_select 0, %s8, %s6
  %10 = sst [smem:[#allocation2]] %s4
  // Predicated region
  $region2: #{custom_deep_q_network.1} parent=0 // pred_check
    _
  $region3: #{custom_deep_q_network.1} parent=0 // pred_check_branch
    %12 = sbr.rel (0) target = $region5
  $region4: #{custom_deep_q_network.1} parent=0 // pred_region
    _
  $region5: #{custom_deep_q_network.1} parent=0 // pred_fallthru
    _
  // Predicated region
  $region6: #{custom_deep_q_network.1} parent=0 // pred_check
    _
  $region7: #{custom_deep_q_network.1} parent=0 // pred_check_branch
    %14 = sbr.rel (0) target = $region9
  $region8: #{custom_deep_q_network.1} parent=0 // pred_region
    _
  $region9: #{custom_deep_q_network.1} parent=0 // pred_fallthru
    _
  // Predicated region
  $region10: #{custom_deep_q_network.1} parent=0 // pred_check
    _
  $region11: #{custom_deep_q_network.1} parent=0 // pred_check_branch
    %16 = sbr.rel (0) target = $region13
  $region12: #{custom_deep_q_network.1} parent=0 // pred_region
    _
  $region13: #{custom_deep_q_network.1} parent=0 // pred_fallthru
    _
  // Predicated region
  $region14: #{custom_deep_q_network.1} parent=0 // pred_check
    _
  $region15: #{custom_deep_q_network.1} parent=0 // pred_check_branch
    %18 = sbr.rel (0) target = $region17
  $region16: #{custom_deep_q_network.1} parent=0 // pred_region
    _
  $region17: #{custom_deep_q_network.1} parent=0 // pred_fallthru
    _
  // Predicated region
  $region18: #{custom_deep_q_network.1} parent=0 // pred_check
    _
  $region19: #{custom_deep_q_network.1} parent=0 // pred_check_branch
    %20 = sbr.rel (0) target = $region21
  $region20: #{custom_deep_q_network.1} parent=0 // pred_region
    _
  $region21: #{custom_deep_q_network.1} parent=0 // pred_fallthru
    _
  %v21 = vld [vmem:[%s0] sm:$0xff]
  %v22 = vld [vmem:[%s1] sm:$0xff]
  %v23 = vld [vmem:[%s1 + $0x8] sm:$0xff]
  %v24 = vld [vmem:[%s1 + $0x10] sm:$0xff]
  %v25 = vld [vmem:[%s1 + $0x18] sm:$0xff]
  %v26 = vld [vmem:[%s1 + $0x20] sm:$0xff]
  %v27 = vld [vmem:[%s1 + $0x28] sm:$0xff]
  %v28 = vld [vmem:[%s1 + $0x30] sm:$0xff]
  %v29 = vld [vmem:[%s1 + $0x38] sm:$0xff]
  %vm30 = vcmask 64512
  %v32 = vsel %vm30, %v22, 0
  %v35 = vsel %vm30, %v23, 0
  %v38 = vsel %vm30, %v24, 0
  %v41 = vsel %vm30, %v25, 0
  %v44 = vsel %vm30, %v26, 0
  %v47 = vsel %vm30, %v27, 0
  %v50 = vsel %vm30, %v28, 0
  %v53 = vsel %vm30, %v29, 0
  %55 = vmatprep.subr.mxu0 0.0
  %56 = vmatpush1.msra.mxu0 0.0
  %57 = vmatprep.subr.mxu0 0.0
  %58 = vmatpush1.msra.mxu0 0.0
  %59 = vmatprep.subr.mxu0 0.0
  %60 = vmatpush1.msra.mxu0 0.0
  %61 = vmatprep.subr.mxu0 0.0
  %62 = vmatpush1.msra.mxu0 0.0
  %63 = vmatprep.subr.mxu0 0.0
  %64 = vmatpush1.msra.mxu0 0.0
  %65 = vmatprep.subr.mxu0 0.0
  %66 = vmatpush1.msra.mxu0 0.0
  %67 = vmatprep.subr.mxu0 0.0
  %68 = vmatpush1.msra.mxu0 0.0
  %69 = vmatprep.subr.mxu0 0.0
  %70 = vmatpush1.msra.mxu0 0.0
  %71 = vmatprep.subr.mxu0 0.0
  %72 = vmatpush1.msra.mxu0 0.0
  %73 = vmatprep.subr.mxu0 0.0
  %74 = vmatpush1.msra.mxu0 0.0
  %75 = vmatprep.subr.mxu0 0.0
  %76 = vmatpush1.msra.mxu0 0.0
  %77 = vmatprep.subr.mxu0 0.0
  %78 = vmatpush1.msra.mxu0 0.0
  %79 = vmatprep.subr.mxu0 0.0
  %80 = vmatpush1.msra.mxu0 0.0
  %81 = vmatprep.subr.mxu0 0.0
  %82 = vmatpush1.msra.mxu0 0.0
  %83 = vmatprep.subr.mxu0 0.0
  %84 = vmatpush1.msra.mxu0 0.0
  %85 = vmatprep.subr.mxu0 0.0
  %86 = vmatpush1.msra.mxu0 %v21
  %87 = vmatprep.subr.mxu0 0.0
  %88 = vmatpush2.msra.mxu0 0.0
  %89 = vmatprep.subr.mxu0 0.0
  %90 = vmatpush2.msra.mxu0 0.0
  %91 = vmatprep.subr.mxu0 0.0
  %92 = vmatpush2.msra.mxu0 0.0
  %93 = vmatprep.subr.mxu0 0.0
  %94 = vmatpush2.msra.mxu0 0.0
  %95 = vmatprep.subr.mxu0 0.0
  %96 = vmatpush2.msra.mxu0 0.0
  %97 = vmatprep.subr.mxu0 0.0
  %98 = vmatpush2.msra.mxu0 0.0
  %99 = vmatprep.subr.mxu0 0.0
  %100 = vmatpush2.msra.mxu0 0.0
  %101 = vmatprep.subr.mxu0 0.0
  %102 = vmatpush2.msra.mxu0 0.0
  %103 = vmatprep.subr.mxu0 0.0
  %104 = vmatpush2.msra.mxu0 0.0
  %105 = vmatprep.subr.mxu0 0.0
  %106 = vmatpush2.msra.mxu0 0.0
  %107 = vmatprep.subr.mxu0 0.0
  %108 = vmatpush2.msra.mxu0 0.0
  %109 = vmatprep.subr.mxu0 0.0
  %110 = vmatpush2.msra.mxu0 0.0
  %111 = vmatprep.subr.mxu0 0.0
  %112 = vmatpush2.msra.mxu0 0.0
  %113 = vmatprep.subr.mxu0 0.0
  %114 = vmatpush2.msra.mxu0 0.0
  %115 = vmatprep.subr.mxu0 0.0
  %116 = vmatpush2.msra.mxu0 0.0
  %117 = vmatprep.subr.mxu0 0.0
  %118 = vmatpush2.msra.mxu0 0.0
  %119 = vmatprep.mubr.f32.mxu0 0.0
  %120 = vmatmul.mubr.f32.gmra.mxu0 %v32
  %v121 = vpop.f32.mrf.mxu0
  %v122 = vadd.f32 0.0, %v121
  %v123 = vpop.f32.mrf.mxu0
  %124 = vmatprep.mubr.f32.mxu0 0.0
  %125 = vmatmul.mubr.f32.gmra.mxu0 %v35
  %v126 = vpop.f32.mrf.mxu0
  %v127 = vadd.f32 0.0, %v126
  %v128 = vpop.f32.mrf.mxu0
  %129 = vmatprep.mubr.f32.mxu0 0.0
  %130 = vmatmul.mubr.f32.gmra.mxu0 %v38
  %v131 = vpop.f32.mrf.mxu0
  %v132 = vadd.f32 0.0, %v131
  %v133 = vpop.f32.mrf.mxu0
  %134 = vmatprep.mubr.f32.mxu0 0.0
  %135 = vmatmul.mubr.f32.gmra.mxu0 %v41
  %v136 = vpop.f32.mrf.mxu0
  %v137 = vadd.f32 0.0, %v136
  %v138 = vpop.f32.mrf.mxu0
  %139 = vmatprep.mubr.f32.mxu0 0.0
  %140 = vmatmul.mubr.f32.gmra.mxu0 %v44
  %v141 = vpop.f32.mrf.mxu0
  %v142 = vadd.f32 0.0, %v141
  %v143 = vpop.f32.mrf.mxu0
  %144 = vmatprep.mubr.f32.mxu0 0.0
  %145 = vmatmul.mubr.f32.gmra.mxu0 %v47
  %v146 = vpop.f32.mrf.mxu0
  %v147 = vadd.f32 0.0, %v146
  %v148 = vpop.f32.mrf.mxu0
  %149 = vmatprep.mubr.f32.mxu0 0.0
  %150 = vmatmul.mubr.f32.gmra.mxu0 %v50
  %v151 = vpop.f32.mrf.mxu0
  %v152 = vadd.f32 0.0, %v151
  %v153 = vpop.f32.mrf.mxu0
  %154 = vmatprep.mubr.f32.mxu0 0.0
  %155 = vmatmul.mubr.f32.gmra.mxu0 %v53
  %v156 = vpop.f32.mrf.mxu0
  %v157 = vadd.f32 0.0, %v156
  %v158 = vpop.f32.mrf.mxu0
  %159 = vdwg.mxu0
  %v160 = vmax.f32 %v122, 0.0
  %v161 = vmax.f32 %v127, 0.0
  %v162 = vmax.f32 %v132, 0.0
  %v163 = vmax.f32 %v137, 0.0
  %v164 = vmax.f32 %v142, 0.0
  %v165 = vmax.f32 %v147, 0.0
  %v166 = vmax.f32 %v152, 0.0
  %v167 = vmax.f32 %v157, 0.0
  %v168 = vld [vmem:[%s2] sm:$0xff]
  %v169 = vld [vmem:[%s2 + $0x8] sm:$0xff]
  %v170 = vld [vmem:[%s2 + $0x10] sm:$0xff]
  %v171 = vld [vmem:[%s2 + $0x18] sm:$0xff]
  %v172 = vld [vmem:[%s2 + $0x20] sm:$0xff]
  %v173 = vld [vmem:[%s2 + $0x28] sm:$0xff]
  %v174 = vld [vmem:[%s2 + $0x30] sm:$0xff]
  %v175 = vld [vmem:[%s2 + $0x38] sm:$0xff]
  %v176 = vld [vmem:[%s3] sm:$0xff]
  %v177 = vld [vmem:[%s3 + $0x8] sm:$0xff]
  %v178 = vld [vmem:[%s3 + $0x10] sm:$0xff]
  %v179 = vld [vmem:[%s3 + $0x18] sm:$0xff]
  %v180 = vld [vmem:[%s3 + $0x20] sm:$0xff]
  %v181 = vld [vmem:[%s3 + $0x28] sm:$0xff]
  %v182 = vld [vmem:[%s3 + $0x30] sm:$0xff]
  %v183 = vld [vmem:[%s3 + $0x38] sm:$0xff]
  %185 = vset.pattern.permute.xlu0 0
  %186 = vperm.xlu0 %185, %v176
  %v187 = vpop.permute.xlu0 %186
  %190 = vset.pattern.permute.xlu0 0
  %191 = vperm.xlu0 %190, %v177
  %v192 = vpop.permute.xlu0 %191
  %195 = vset.pattern.permute.xlu0 0
  %196 = vperm.xlu0 %195, %v178
  %v197 = vpop.permute.xlu0 %196
  %200 = vset.pattern.permute.xlu0 0
  %201 = vperm.xlu0 %200, %v179
  %v202 = vpop.permute.xlu0 %201
  %205 = vset.pattern.permute.xlu0 0
  %206 = vperm.xlu0 %205, %v180
  %v207 = vpop.permute.xlu0 %206
  %210 = vset.pattern.permute.xlu0 0
  %211 = vperm.xlu0 %210, %v181
  %v212 = vpop.permute.xlu0 %211
  %215 = vset.pattern.permute.xlu0 0
  %216 = vperm.xlu0 %215, %v182
  %v217 = vpop.permute.xlu0 %216
  %220 = vset.pattern.permute.xlu0 0
  %221 = vperm.xlu0 %220, %v183
  %v222 = vpop.permute.xlu0 %221
  %vm224 = vcmask 523264
  %v226 = vsel %vm224, %v168, 0
  %v229 = vsel %vm224, %v169, 0
  %v232 = vsel %vm224, %v170, 0
  %v235 = vsel %vm224, %v171, 0
  %v238 = vsel %vm224, %v172, 0
  %v241 = vsel %vm224, %v173, 0
  %v244 = vsel %vm224, %v174, 0
  %v247 = vsel %vm224, %v175, 0
  %249 = vmatprep.subr.mxu0 0.0
  %250 = vmatpush1.msra.mxu0 0.0
  %251 = vmatprep.subr.mxu0 0.0
  %252 = vmatpush1.msra.mxu0 0.0
  %253 = vmatprep.subr.mxu0 0.0
  %254 = vmatpush1.msra.mxu0 0.0
  %255 = vmatprep.subr.mxu0 0.0
  %256 = vmatpush1.msra.mxu0 0.0
  %257 = vmatprep.subr.mxu0 0.0
  %258 = vmatpush1.msra.mxu0 0.0
  %259 = vmatprep.subr.mxu0 0.0
  %260 = vmatpush1.msra.mxu0 0.0
  %261 = vmatprep.subr.mxu0 0.0
  %262 = vmatpush1.msra.mxu0 0.0
  %263 = vmatprep.subr.mxu0 0.0
  %264 = vmatpush1.msra.mxu0 0.0
  %265 = vmatprep.subr.mxu0 0.0
  %266 = vmatpush1.msra.mxu0 %v167
  %267 = vmatprep.subr.mxu0 0.0
  %268 = vmatpush1.msra.mxu0 %v166
  %269 = vmatprep.subr.mxu0 0.0
  %270 = vmatpush1.msra.mxu0 %v165
  %271 = vmatprep.subr.mxu0 0.0
  %272 = vmatpush1.msra.mxu0 %v164
  %273 = vmatprep.subr.mxu0 0.0
  %274 = vmatpush1.msra.mxu0 %v163
  %275 = vmatprep.subr.mxu0 0.0
  %276 = vmatpush1.msra.mxu0 %v162
  %277 = vmatprep.subr.mxu0 0.0
  %278 = vmatpush1.msra.mxu0 %v161
  %279 = vmatprep.subr.mxu0 0.0
  %280 = vmatpush1.msra.mxu0 %v160
  %281 = vmatprep.subr.mxu0 0.0
  %282 = vmatpush2.msra.mxu0 0.0
  %283 = vmatprep.subr.mxu0 0.0
  %284 = vmatpush2.msra.mxu0 0.0
  %285 = vmatprep.subr.mxu0 0.0
  %286 = vmatpush2.msra.mxu0 0.0
  %287 = vmatprep.subr.mxu0 0.0
  %288 = vmatpush2.msra.mxu0 0.0
  %289 = vmatprep.subr.mxu0 0.0
  %290 = vmatpush2.msra.mxu0 0.0
  %291 = vmatprep.subr.mxu0 0.0
  %292 = vmatpush2.msra.mxu0 0.0
  %293 = vmatprep.subr.mxu0 0.0
  %294 = vmatpush2.msra.mxu0 0.0
  %295 = vmatprep.subr.mxu0 0.0
  %296 = vmatpush2.msra.mxu0 0.0
  %297 = vmatprep.subr.mxu0 0.0
  %298 = vmatpush2.msra.mxu0 0.0
  %299 = vmatprep.subr.mxu0 0.0
  %300 = vmatpush2.msra.mxu0 0.0
  %301 = vmatprep.subr.mxu0 0.0
  %302 = vmatpush2.msra.mxu0 0.0
  %303 = vmatprep.subr.mxu0 0.0
  %304 = vmatpush2.msra.mxu0 0.0
  %305 = vmatprep.subr.mxu0 0.0
  %306 = vmatpush2.msra.mxu0 0.0
  %307 = vmatprep.subr.mxu0 0.0
  %308 = vmatpush2.msra.mxu0 0.0
  %309 = vmatprep.subr.mxu0 0.0
  %310 = vmatpush2.msra.mxu0 0.0
  %311 = vmatprep.subr.mxu0 0.0
  %312 = vmatpush2.msra.mxu0 0.0
  %313 = vmatprep.mubr.f32.mxu0 0.0
  %314 = vmatmul.mubr.f32.gmra.mxu0 %v226
  %v315 = vpop.f32.mrf.mxu0
  %v316 = vadd.f32 %v187, %v315
  %v317 = vpop.f32.mrf.mxu0
  %318 = vmatprep.mubr.f32.mxu0 0.0
  %319 = vmatmul.mubr.f32.gmra.mxu0 %v229
  %v320 = vpop.f32.mrf.mxu0
  %v321 = vadd.f32 %v192, %v320
  %v322 = vpop.f32.mrf.mxu0
  %323 = vmatprep.mubr.f32.mxu0 0.0
  %324 = vmatmul.mubr.f32.gmra.mxu0 %v232
  %v325 = vpop.f32.mrf.mxu0
  %v326 = vadd.f32 %v197, %v325
  %v327 = vpop.f32.mrf.mxu0
  %328 = vmatprep.mubr.f32.mxu0 0.0
  %329 = vmatmul.mubr.f32.gmra.mxu0 %v235
  %v330 = vpop.f32.mrf.mxu0
  %v331 = vadd.f32 %v202, %v330
  %v332 = vpop.f32.mrf.mxu0
  %333 = vmatprep.mubr.f32.mxu0 0.0
  %334 = vmatmul.mubr.f32.gmra.mxu0 %v238
  %v335 = vpop.f32.mrf.mxu0
  %v336 = vadd.f32 %v207, %v335
  %v337 = vpop.f32.mrf.mxu0
  %338 = vmatprep.mubr.f32.mxu0 0.0
  %339 = vmatmul.mubr.f32.gmra.mxu0 %v241
  %v340 = vpop.f32.mrf.mxu0
  %v341 = vadd.f32 %v212, %v340
  %v342 = vpop.f32.mrf.mxu0
  %343 = vmatprep.mubr.f32.mxu0 0.0
  %344 = vmatmul.mubr.f32.gmra.mxu0 %v244
  %v345 = vpop.f32.mrf.mxu0
  %v346 = vadd.f32 %v217, %v345
  %v347 = vpop.f32.mrf.mxu0
  %348 = vmatprep.mubr.f32.mxu0 0.0
  %349 = vmatmul.mubr.f32.gmra.mxu0 %v247
  %v350 = vpop.f32.mrf.mxu0
  %v351 = vadd.f32 %v222, %v350
  %v352 = vpop.f32.mrf.mxu0
  %353 = vdwg.mxu0
  %v354 = vmax.f32 %v316, 0.0
  %v355 = vmax.f32 %v321, 0.0
  %v356 = vmax.f32 %v326, 0.0
  %v357 = vmax.f32 %v331, 0.0
  %v358 = vmax.f32 %v336, 0.0
  %v359 = vmax.f32 %v341, 0.0
  %v360 = vmax.f32 %v346, 0.0
  %v361 = vmax.f32 %v351, 0.0
  %362 = vset.pattern.permute.xlu0 1
  %363 = vperm.xlu0 %362, %v176
  %v364 = vpop.permute.xlu0 %363
  %366 = vset.pattern.permute.xlu0 1
  %367 = vperm.xlu0 %366, %v177
  %v368 = vpop.permute.xlu0 %367
  %370 = vset.pattern.permute.xlu0 1
  %371 = vperm.xlu0 %370, %v178
  %v372 = vpop.permute.xlu0 %371
  %374 = vset.pattern.permute.xlu0 1
  %375 = vperm.xlu0 %374, %v179
  %v376 = vpop.permute.xlu0 %375
  %378 = vset.pattern.permute.xlu0 1
  %379 = vperm.xlu0 %378, %v180
  %v380 = vpop.permute.xlu0 %379
  %382 = vset.pattern.permute.xlu0 1
  %383 = vperm.xlu0 %382, %v181
  %v384 = vpop.permute.xlu0 %383
  %386 = vset.pattern.permute.xlu0 1
  %387 = vperm.xlu0 %386, %v182
  %v388 = vpop.permute.xlu0 %387
  %390 = vset.pattern.permute.xlu0 1
  %391 = vperm.xlu0 %390, %v183
  %v392 = vpop.permute.xlu0 %391
  %v394 = vmul.f32 %v354, %v364
  %v395 = vmul.f32 %v355, %v368
  %v396 = vmul.f32 %v356, %v372
  %v397 = vmul.f32 %v357, %v376
  %v398 = vmul.f32 %v358, %v380
  %v399 = vmul.f32 %v359, %v384
  %v400 = vmul.f32 %v360, %v388
  %v401 = vmul.f32 %v361, %v392
  %v402 = vadd.f32 %v394, %v395
  %v403 = vadd.f32 %v402, %v396
  %v404 = vadd.f32 %v403, %v397
  %v405 = vadd.f32 %v404, %v398
  %v406 = vadd.f32 %v405, %v399
  %v407 = vadd.f32 %v406, %v400
  %v408 = vadd.f32 %v407, %v401
  %v409 = vrot.slane %v408, 4
  %v410 = vadd.f32 %v408, %v409
  %v411 = vrot.slane %v410, 2
  %v412 = vadd.f32 %v410, %v411
  %v413 = vrot.slane %v412, 1
  %v414 = vadd.f32 %v412, %v413
  %s415 = sld [smem:[#allocation2]]
  %v416 = vstv %s415
  %v417 = vadd.f32 %v414, %v416
  %418 = vst [vmem:[%s5] sm:$0x1] %v417
  // Predicated region
  $region22: #{custom_deep_q_network.1} parent=0 // pred_check
    _
  $region23: #{custom_deep_q_network.1} parent=0 // pred_check_branch
    %420 = sbr.rel (0) target = $region25
  $region24: #{custom_deep_q_network.1} parent=0 // pred_region
    _
  $region25: #{custom_deep_q_network.1} parent=0 // pred_fallthru
    _
  // Predicated region
  $region26: #{custom_deep_q_network.1} parent=0 // pred_check
    _
  $region27: #{custom_deep_q_network.1} parent=0 // pred_check_branch
    %422 = sbr.rel (0) target = $region29
  $region28: #{custom_deep_q_network.1} parent=0 // pred_region
    _
  $region29: #{custom_deep_q_network.1} parent=0 // pred_fallthru
    _

</llo_original>
